<compile_context>
chip_gen: v5e
topology: v5e:2x2
jax: 0.10.0
libtpu: 0.0.40
codegen_flags: <defaults>
</compile_context>

<pallas_src>
import functools

import numpy as np
import jax
import jax.numpy as jnp
from jax import lax
from jax.experimental import pallas as pl
from jax.experimental.pallas import tpu as pltpu


def _round_up(x, m):
    return (x + m - 1) // m * m


def viblstm_kernel(xw_ref, whh_ref, ab_ref, out_ref, h_ref, c_ref, *, unroll):
    # xw_ref : (t_chunk, bs, 4H) f32   x @ (pre*W_ih)^T + pre*bias, this chunk
    # whh_ref: (H, 4H)           bf16  (pre*W_hh)^T  -- resident across the grid
    # ab_ref : (2, 4H)           f32   rows [a; b] of the fused activation/IB affine
    # out_ref: (t_chunk, bs, H)  f32   hidden states for this chunk
    # h_ref/c_ref: (bs, H)       f32   recurrent state carried across time chunks
    t_chunk, bs, four_h = xw_ref.shape
    H = out_ref.shape[-1]

    @pl.when(pl.program_id(1) == 0)           # first time-chunk of this batch tile
    def _init():
        h_ref[...] = jnp.zeros_like(h_ref)
        c_ref[...] = jnp.zeros_like(c_ref)

    # Hoist all loop invariants (JAX does not CSE re-loads / re-broadcasts).
    whh = whh_ref[...]                                        # (H, 4H) bf16
    a = jnp.broadcast_to(ab_ref[0:1, :], (bs, four_h))        # (bs, 4H) f32
    b = jnp.broadcast_to(ab_ref[1:2, :], (bs, four_h))        # (bs, 4H) f32

    def step(t, carry):
        h, c = carry
        # Only this small recurrent matmul sits on the serial h->h critical path.
        gates = xw_ref[t] + jnp.dot(h.astype(whh.dtype), whh,
                                    preferred_element_type=jnp.float32)
        # Single-tanh activation: sigmoid lanes already carry the x/2 pre-scale
        # (folded into the weights); IB scales folded into (a, b).
        act = a * jnp.tanh(gates) + b
        i_t = act[:, 0 * H:1 * H]
        f_t = act[:, 1 * H:2 * H]
        g_t = act[:, 2 * H:3 * H]
        o_t = act[:, 3 * H:4 * H]
        c_new = f_t * c + i_t * g_t
        h_new = o_t * jnp.tanh(c_new)
        out_ref[t] = h_new                                    # dense (bs, H) store
        return h_new, c_new

    h, c = lax.fori_loop(0, t_chunk, step, (h_ref[...], c_ref[...]), unroll=unroll)
    h_ref[...] = h
    c_ref[...] = c


def _vmem_capacity_bytes():
    try:
        return int(pltpu.get_tpu_info().vmem_capacity_bytes)
    except Exception:
        return 128 << 20


def _tensorcores_per_chip():
    try:
        kind = jax.devices()[0].device_kind.lower()
    except Exception:
        return 1
    return 2 if ("v7" in kind or "tpu7" in kind) else 1


def _pick_time_chunk(seq, bs_tile, h_pad, budget_bytes):
    """Largest divisor of seq whose double-buffered xW/out chunks fit the budget."""
    per_step = 2 * (bs_tile * 4 * h_pad + bs_tile * h_pad) * 4   # xW + out, x2 bufs, f32
    max_steps = max(1, budget_bytes // max(per_step, 1))
    if seq <= max_steps:
        return seq
    for t in range(int(min(seq, max_steps)), 0, -1):
        if seq % t == 0:
            return t
    return seq


def viblstm_forward(x, weight_ih, weight_hh, bias_ih, bias_hh, ib_mu, ib_logD,
                    matmul_dtype=jnp.bfloat16):
    """x: (batch, seq, input_sz) f32 -> hidden_seq: (batch, seq, hidden) f32.

    Pass matmul_dtype=jnp.float32 if bit-level parity with an f32 LSTM matters
    over very long sequences (bf16 h-cast error compounds across timesteps).
    """
    bs, seq, input_sz = x.shape
    H = weight_hh.shape[1]
    eps = 1e-8

    # Lane/sublane-dense padding: each gate block padded to a multiple of 128
    # lanes, batch padded to a multiple of 8 sublanes.  Padded lanes have zero
    # weights/bias/scales, so their activations, c and h stay exactly 0 and
    # contribute nothing to the recurrent matmul.
    H_pad = _round_up(H, 128)
    bs_pad = _round_up(bs, 8)

    # Deterministic IB scales (eval path): z = mu * (log_alpha < 0), rows [i,f,g,o].
    logalpha = ib_logD - jnp.log(ib_mu * ib_mu + eps)
    scales = ib_mu * (logalpha < 0.0).astype(jnp.float32)              # (4, H)
    scales = jnp.pad(scales, ((0, 0), (0, H_pad - H)))                 # (4, H_pad)

    # Single-tanh fusion: sigmoid(x) = 0.5*tanh(x/2) + 0.5.
    pre = jnp.array([0.5, 0.5, 1.0, 0.5], jnp.float32)   # gate argument pre-scale
    a_c = jnp.array([0.5, 0.5, 1.0, 0.5], jnp.float32)   # post-scale on tanh
    b_c = jnp.array([0.5, 0.5, 0.0, 0.5], jnp.float32)   # post-offset
    a_vec = (scales * a_c[:, None]).reshape(1, 4 * H_pad)
    b_vec = (scales * b_c[:, None]).reshape(1, 4 * H_pad)
    ab = jnp.concatenate([a_vec, b_vec], axis=0)                       # (2, 4H_pad)

    # Per-gate padded, pre-scaled weights / bias (the x/2 fold is an exact
    # power-of-two scale: zero numeric cost, zero runtime cost in the loop).
    wih = jnp.pad(weight_ih.reshape(4, H, input_sz),
                  ((0, 0), (0, H_pad - H), (0, 0))) * pre[:, None, None]
    whh = jnp.pad(weight_hh.reshape(4, H, H),
                  ((0, 0), (0, H_pad - H), (0, H_pad - H))) * pre[:, None, None]
    bias = jnp.pad((bias_ih + bias_hh).reshape(4, H),
                   ((0, 0), (0, H_pad - H))) * pre[:, None]
    wih_t = wih.reshape(4 * H_pad, input_sz).T.astype(matmul_dtype)    # (in, 4H_pad)
    whh_t = whh.reshape(4 * H_pad, H_pad).T.astype(matmul_dtype)       # (H_pad, 4H_pad)
    bias_v = bias.reshape(4 * H_pad).astype(jnp.float32)

    # Input projection for ALL timesteps in ONE matmul, off the recurrence's
    # critical path, emitted directly in the kernel's time-major layout (no
    # standalone transposed x / xW copy in HBM).
    x_pad = jnp.pad(x, ((0, bs_pad - bs), (0, 0), (0, 0))).astype(matmul_dtype)
    xw = jnp.einsum("bsi,ih->sbh", x_pad, wih_t,
                    preferred_element_type=jnp.float32) + bias_v       # (seq, bs_pad, 4H_pad)
    # TODO(synk): stream xw/out in bf16 (halves the dominant HBM<->VMEM DMA)
    #   once verified against the accuracy tolerance.

    # Generation-aware VMEM budgeting (v7x: 64 MiB physical, v5e/v6e: 128 MiB).
    cap = _vmem_capacity_bytes()
    vmem_limit = min(cap, max(32 << 20, int(0.70 * cap)))
    resident = 2 * (whh_t.size * whh_t.dtype.itemsize + ab.size * 4)   # double-buffered invariants
    chunk_cap = (16 << 20) if cap >= (96 << 20) else (6 << 20)
    chunk_budget = max(1 << 20, min(chunk_cap, vmem_limit - resident - (2 << 20)))

    # Batch tiling: give a 2-TensorCore chip (v7x) one batch tile per core;
    # single-TC parts keep one tile (splitting only adds serial grid overhead).
    n_b = 2 if (_tensorcores_per_chip() >= 2 and bs_pad % 16 == 0) else 1
    bs_tile = bs_pad // n_b

    t_chunk = _pick_time_chunk(seq, bs_tile, H_pad, chunk_budget)
    gate_vregs = (bs_tile * 4 * H_pad * 4) // 4096
    if t_chunk <= 8:
        unroll = True
    elif gate_vregs > 8:
        unroll = 4      # keep store/spill pressure low (v5e has a single vst slot)
    else:
        unroll = 8

    kernel = functools.partial(viblstm_kernel, unroll=unroll)
    out = pl.pallas_call(
        kernel,
        out_shape=jax.ShapeDtypeStruct((seq, bs_pad, H_pad), jnp.float32),
        grid_spec=pltpu.PrefetchScalarGridSpec(
            num_scalar_prefetch=0,
            grid=(n_b, seq // t_chunk),
            in_specs=[
                pl.BlockSpec((t_chunk, bs_tile, 4 * H_pad), lambda b, s: (s, b, 0)),
                # TODO(synk): on jax versions that accept pl.Buffered(1) for input
                #   specs, single-buffer these two constant-index operands to
                #   reclaim VMEM for larger t_chunk on v7x's 64 MiB.
                pl.BlockSpec((H_pad, 4 * H_pad), lambda b, s: (0, 0)),   # W_hh (resident)
                pl.BlockSpec((2, 4 * H_pad), lambda b, s: (0, 0)),       # (a, b) affine
            ],
            out_specs=pl.BlockSpec((t_chunk, bs_tile, H_pad), lambda b, s: (s, b, 0)),
            scratch_shapes=[
                pltpu.VMEM((bs_tile, H_pad), jnp.float32),   # h carry
                pltpu.VMEM((bs_tile, H_pad), jnp.float32),   # c carry
            ],
        ),
        compiler_params=pltpu.CompilerParams(
            dimension_semantics=("parallel", "arbitrary"),   # batch parallel, time serial
            vmem_limit_bytes=int(vmem_limit),
        ),
        cost_estimate=pl.CostEstimate(
            flops=2 * seq * bs_pad * H_pad * 4 * H_pad,
            transcendentals=seq * bs_pad * 5 * H_pad,
            bytes_accessed=int(xw.size * 4 + seq * bs_pad * H_pad * 4
                               + whh_t.size * whh_t.dtype.itemsize + ab.size * 4),
        ),
    )(xw, whh_t, ab)

    # Time-major inside the kernel keeps every per-step access a full dense
    # vreg; the single off-critical-path layout pass back to (batch, seq, H)
    # plus un-padding is left to XLA.
    # TODO(synk): emit batch-major directly via per-chunk strided output DMA
    #   (pl.ANY out ref + pltpu.make_async_copy) to drop this pass entirely.
    return jnp.transpose(out[:, :bs, :H], (1, 0, 2))


def viblstm_reference(x, weight_ih, weight_hh, bias_ih, bias_hh, ib_mu, ib_logD,
                      matmul_dtype=jnp.bfloat16):
    """Plain-JAX reference matching the module semantics and precision choices."""
    bs, seq, input_sz = x.shape
    H = weight_hh.shape[1]
    eps = 1e-8
    logalpha = ib_logD - jnp.log(ib_mu * ib_mu + eps)
    sc = ib_mu * (logalpha < 0.0).astype(jnp.float32)            # (4, H)
    wih_t = weight_ih.T.astype(matmul_dtype)
    whh_t = weight_hh.T.astype(matmul_dtype)
    bias = (bias_ih + bias_hh).astype(jnp.float32)

    def step(carry, x_t):
        h, c = carry
        gates = (jnp.dot(x_t.astype(matmul_dtype), wih_t, preferred_element_type=jnp.float32)
                 + jnp.dot(h.astype(matmul_dtype), whh_t, preferred_element_type=jnp.float32)
                 + bias)
        i = jax.nn.sigmoid(gates[:, 0 * H:1 * H]) * sc[0]
        f = jax.nn.sigmoid(gates[:, 1 * H:2 * H]) * sc[1]
        g = jnp.tanh(gates[:, 2 * H:3 * H]) * sc[2]
        o = jax.nn.sigmoid(gates[:, 3 * H:4 * H]) * sc[3]
        c = f * c + i * g
        h = o * jnp.tanh(c)
        return (h, c), h

    h0 = jnp.zeros((bs, H), jnp.float32)
    c0 = jnp.zeros((bs, H), jnp.float32)
    _, hs = lax.scan(step, (h0, c0), jnp.transpose(x, (1, 0, 2)))
    return jnp.transpose(hs, (1, 0, 2))


def _xavier_uniform(key, shape):
    fan_out, fan_in = shape
    bound = float(np.sqrt(6.0 / (fan_in + fan_out)))
    return jax.random.uniform(key, shape, jnp.float32, -bound, bound)


if __name__ == "__main__":
    # Small shapes consistent with the module's forward: x: (batch, seq, input_sz)
    batch, seq, input_sz, hidden_sz = 2, 8, 16, 32

    key = jax.random.PRNGKey(0)
    k_x, k_wih, k_whh, k_mu, k_ld = jax.random.split(key, 5)

    x = jax.random.normal(k_x, (batch, seq, input_sz), jnp.float32)

    # LSTM parameters (xavier_uniform for >=2D, zeros for biases, like init_weights)
    weight_ih = _xavier_uniform(k_wih, (4 * hidden_sz, input_sz))
    weight_hh = _xavier_uniform(k_whh, (4 * hidden_sz, hidden_sz))
    bias_ih = jnp.zeros((4 * hidden_sz,), jnp.float32)
    bias_hh = jnp.zeros((4 * hidden_sz,), jnp.float32)

    # InformationBottleneck params for ib0..ib3 (rows: i, f, g, o gates):
    # post_z_mu ~ N(1, 0.01), post_z_logD ~ N(-9, 0.01) (standard VIB init)
    ib_mu = 1.0 + 0.01 * jax.random.normal(k_mu, (4, hidden_sz), jnp.float32)
    ib_logD = -9.0 + 0.01 * jax.random.normal(k_ld, (4, hidden_sz), jnp.float32)

    fwd = jax.jit(viblstm_forward)
    hidden_seq = fwd(x, weight_ih, weight_hh, bias_ih, bias_hh, ib_mu, ib_logD)
    jax.block_until_ready(hidden_seq)

    ref = viblstm_reference(x, weight_ih, weight_hh, bias_ih, bias_hh, ib_mu, ib_logD)
    assert hidden_seq.shape == (batch, seq, hidden_sz)
    assert bool(jnp.all(jnp.isfinite(hidden_seq)))
    max_err = float(jnp.max(jnp.abs(hidden_seq - ref)))
    assert max_err < 2e-3, f"mismatch vs reference: max_err={max_err}"
    print("KERNEL_OK")
</pallas_src>

<mosaic_0001>
module attributes {stable_mosaic.version = 11 : i64} {
  func.func @viblstm_kernel(%arg0: i32, %arg1: i32, %arg2: memref<8x8x512xf32, #tpu.memory_space<vmem>>, %arg3: memref<128x512xbf16, #tpu.memory_space<vmem>>, %arg4: memref<2x512xf32, #tpu.memory_space<vmem>>, %arg5: memref<8x8x128xf32, #tpu.memory_space<vmem>>, %arg6: memref<8x128xf32, #tpu.memory_space<vmem>>, %arg7: memref<8x128xf32, #tpu.memory_space<vmem>>) attributes {dimension_semantics = [#tpu.dimension_semantics<parallel>, #tpu.dimension_semantics<arbitrary>], iteration_bounds = array<i64: 1, 1>, scalar_prefetch = 0 : i64, scratch_operands = 2 : i64, tpu.core_type = #tpu.core_type<tc>, window_params = [{transform_indices = @transform_0, window_bounds = array<i64: 8, 8, 512>}, {pipeline_mode = #tpu.pipeline_mode<synchronous>, transform_indices = @transform_1, window_bounds = array<i64: 128, 512>}, {pipeline_mode = #tpu.pipeline_mode<synchronous>, transform_indices = @transform_2, window_bounds = array<i64: 2, 512>}, {transform_indices = @transform_3, window_bounds = array<i64: 8, 8, 128>}]} {
    %c0_i32 = arith.constant 0 : i32
    %0 = arith.cmpi eq, %arg1, %c0_i32 : i32
    %1 = arith.extui %0 : i1 to i32
    %c0_i32_0 = arith.constant 0 : i32
    %2 = arith.cmpi ne, %1, %c0_i32_0 : i32
    scf.if %2 {
      %cst_53 = arith.constant 0.000000e+00 : f32
      %190 = vector.broadcast %cst_53 : f32 to vector<8x128xf32>
      %c0_54 = arith.constant 0 : index
      %c0_55 = arith.constant 0 : index
      %191 = vector.load %arg6[%c0_54, %c0_55] : memref<8x128xf32, #tpu.memory_space<vmem>>, vector<8x128xf32>
      tpu.vector_store %arg6[%c0_54, %c0_55], %190 {strides = array<i32>} : memref<8x128xf32, #tpu.memory_space<vmem>>, vector<8x128xf32>,
      %cst_56 = arith.constant 0.000000e+00 : f32
      %192 = vector.broadcast %cst_56 : f32 to vector<8x128xf32>
      %c0_57 = arith.constant 0 : index
      %c0_58 = arith.constant 0 : index
      %193 = vector.load %arg7[%c0_57, %c0_58] : memref<8x128xf32, #tpu.memory_space<vmem>>, vector<8x128xf32>
      tpu.vector_store %arg7[%c0_57, %c0_58], %192 {strides = array<i32>} : memref<8x128xf32, #tpu.memory_space<vmem>>, vector<8x128xf32>,
    } else {
    }
    %c0 = arith.constant 0 : index
    %c0_1 = arith.constant 0 : index
    %3 = vector.load %arg3[%c0, %c0_1] : memref<128x512xbf16, #tpu.memory_space<vmem>>, vector<128x512xbf16>
    %c0_2 = arith.constant 0 : index
    %c0_3 = arith.constant 0 : index
    %4 = vector.load %arg4[%c0_2, %c0_3] : memref<2x512xf32, #tpu.memory_space<vmem>>, vector<1x512xf32>
    %5 = vector.shape_cast %4 : vector<1x512xf32> to vector<1x512xf32>
    %6 = vector.broadcast %5 : vector<1x512xf32> to vector<8x512xf32>
    %c1 = arith.constant 1 : index
    %c0_4 = arith.constant 0 : index
    %7 = vector.load %arg4[%c1, %c0_4] : memref<2x512xf32, #tpu.memory_space<vmem>>, vector<1x512xf32>
    %8 = vector.shape_cast %7 : vector<1x512xf32> to vector<1x512xf32>
    %9 = vector.broadcast %8 : vector<1x512xf32> to vector<8x512xf32>
    %c0_5 = arith.constant 0 : index
    %c0_6 = arith.constant 0 : index
    %10 = vector.load %arg6[%c0_5, %c0_6] : memref<8x128xf32, #tpu.memory_space<vmem>>, vector<8x128xf32>
    %c0_7 = arith.constant 0 : index
    %c0_8 = arith.constant 0 : index
    %11 = vector.load %arg7[%c0_7, %c0_8] : memref<8x128xf32, #tpu.memory_space<vmem>>, vector<8x128xf32>
    %c0_i32_9 = arith.constant 0 : i32
    %12 = arith.index_cast %c0_i32_9 : i32 to index
    %c0_10 = arith.constant 0 : index
    %c0_11 = arith.constant 0 : index
    %13 = vector.load %arg2[%12, %c0_10, %c0_11] : memref<8x8x512xf32, #tpu.memory_space<vmem>>, vector<1x8x512xf32>
    %14 = vector.shape_cast %13 : vector<1x8x512xf32> to vector<8x512xf32>
    %15 = arith.truncf %10 : vector<8x128xf32> to vector<8x128xbf16>
    %cst = arith.constant dense<0.000000e+00> : vector<8x512xf32>
    %16 = tpu.matmul %15, %3, %cst {dimension_numbers = #tpu.dot_dimension_numbers<[1], [0], [0], [1], [0, 0, 1, 1], [], []>} : vector<8x128xbf16>, vector<128x512xbf16>, vector<8x512xf32> -> vector<8x512xf32>
    %17 = arith.addf %14, %16 : vector<8x512xf32>
    %18 = math.tanh %17 : vector<8x512xf32>
    %19 = arith.mulf %6, %18 : vector<8x512xf32>
    %20 = arith.addf %19, %9 : vector<8x512xf32>
    %21 = vector.extract_strided_slice %20 {offsets = [0, 0], sizes = [8, 128], strides = [1, 1]} : vector<8x512xf32> to vector<8x128xf32>
    %22 = vector.extract_strided_slice %20 {offsets = [0, 128], sizes = [8, 128], strides = [1, 1]} : vector<8x512xf32> to vector<8x128xf32>
    %23 = vector.extract_strided_slice %20 {offsets = [0, 256], sizes = [8, 128], strides = [1, 1]} : vector<8x512xf32> to vector<8x128xf32>
    %24 = vector.extract_strided_slice %20 {offsets = [0, 384], sizes = [8, 128], strides = [1, 1]} : vector<8x512xf32> to vector<8x128xf32>
    %25 = arith.mulf %22, %11 : vector<8x128xf32>
    %26 = arith.mulf %21, %23 : vector<8x128xf32>
    %27 = arith.addf %25, %26 : vector<8x128xf32>
    %28 = math.tanh %27 : vector<8x128xf32>
    %29 = arith.mulf %24, %28 : vector<8x128xf32>
    %30 = arith.index_cast %c0_i32_9 : i32 to index
    %c0_12 = arith.constant 0 : index
    %c0_13 = arith.constant 0 : index
    %31 = vector.load %arg5[%30, %c0_12, %c0_13] : memref<8x8x128xf32, #tpu.memory_space<vmem>>, vector<1x8x128xf32>
    %32 = vector.shape_cast %31 : vector<1x8x128xf32> to vector<8x128xf32>
    %33 = vector.shape_cast %29 : vector<8x128xf32> to vector<1x8x128xf32>
    tpu.vector_store %arg5[%30, %c0_12, %c0_13], %33 {strides = array<i32>} : memref<8x8x128xf32, #tpu.memory_space<vmem>>, vector<1x8x128xf32>,
    %c1_i32 = arith.constant 1 : i32
    %34 = arith.index_cast %c1_i32 : i32 to index
    %c0_14 = arith.constant 0 : index
    %c0_15 = arith.constant 0 : index
    %35 = vector.load %arg2[%34, %c0_14, %c0_15] : memref<8x8x512xf32, #tpu.memory_space<vmem>>, vector<1x8x512xf32>
    %36 = vector.shape_cast %35 : vector<1x8x512xf32> to vector<8x512xf32>
    %37 = arith.truncf %29 : vector<8x128xf32> to vector<8x128xbf16>
    %cst_16 = arith.constant dense<0.000000e+00> : vector<8x512xf32>
    %38 = tpu.matmul %37, %3, %cst_16 {dimension_numbers = #tpu.dot_dimension_numbers<[1], [0], [0], [1], [0, 0, 1, 1], [], []>} : vector<8x128xbf16>, vector<128x512xbf16>, vector<8x512xf32> -> vector<8x512xf32>
    %39 = arith.addf %36, %38 : vector<8x512xf32>
    %40 = math.tanh %39 : vector<8x512xf32>
    %41 = arith.mulf %6, %40 : vector<8x512xf32>
    %42 = arith.addf %41, %9 : vector<8x512xf32>
    %43 = vector.extract_strided_slice %42 {offsets = [0, 0], sizes = [8, 128], strides = [1, 1]} : vector<8x512xf32> to vector<8x128xf32>
    %44 = vector.extract_strided_slice %42 {offsets = [0, 128], sizes = [8, 128], strides = [1, 1]} : vector<8x512xf32> to vector<8x128xf32>
    %45 = vector.extract_strided_slice %42 {offsets = [0, 256], sizes = [8, 128], strides = [1, 1]} : vector<8x512xf32> to vector<8x128xf32>
    %46 = vector.extract_strided_slice %42 {offsets = [0, 384], sizes = [8, 128], strides = [1, 1]} : vector<8x512xf32> to vector<8x128xf32>
    %47 = arith.mulf %44, %27 : vector<8x128xf32>
    %48 = arith.mulf %43, %45 : vector<8x128xf32>
    %49 = arith.addf %47, %48 : vector<8x128xf32>
    %50 = math.tanh %49 : vector<8x128xf32>
    %51 = arith.mulf %46, %50 : vector<8x128xf32>
    %52 = arith.index_cast %c1_i32 : i32 to index
    %c0_17 = arith.constant 0 : index
    %c0_18 = arith.constant 0 : index
    %53 = vector.load %arg5[%52, %c0_17, %c0_18] : memref<8x8x128xf32, #tpu.memory_space<vmem>>, vector<1x8x128xf32>
    %54 = vector.shape_cast %53 : vector<1x8x128xf32> to vector<8x128xf32>
    %55 = vector.shape_cast %51 : vector<8x128xf32> to vector<1x8x128xf32>
    tpu.vector_store %arg5[%52, %c0_17, %c0_18], %55 {strides = array<i32>} : memref<8x8x128xf32, #tpu.memory_space<vmem>>, vector<1x8x128xf32>,
    %c2_i32 = arith.constant 2 : i32
    %56 = arith.index_cast %c2_i32 : i32 to index
    %c0_19 = arith.constant 0 : index
    %c0_20 = arith.constant 0 : index
    %57 = vector.load %arg2[%56, %c0_19, %c0_20] : memref<8x8x512xf32, #tpu.memory_space<vmem>>, vector<1x8x512xf32>
    %58 = vector.shape_cast %57 : vector<1x8x512xf32> to vector<8x512xf32>
    %59 = arith.truncf %51 : vector<8x128xf32> to vector<8x128xbf16>
    %cst_21 = arith.constant dense<0.000000e+00> : vector<8x512xf32>
    %60 = tpu.matmul %59, %3, %cst_21 {dimension_numbers = #tpu.dot_dimension_numbers<[1], [0], [0], [1], [0, 0, 1, 1], [], []>} : vector<8x128xbf16>, vector<128x512xbf16>, vector<8x512xf32> -> vector<8x512xf32>
    %61 = arith.addf %58, %60 : vector<8x512xf32>
    %62 = math.tanh %61 : vector<8x512xf32>
    %63 = arith.mulf %6, %62 : vector<8x512xf32>
    %64 = arith.addf %63, %9 : vector<8x512xf32>
    %65 = vector.extract_strided_slice %64 {offsets = [0, 0], sizes = [8, 128], strides = [1, 1]} : vector<8x512xf32> to vector<8x128xf32>
    %66 = vector.extract_strided_slice %64 {offsets = [0, 128], sizes = [8, 128], strides = [1, 1]} : vector<8x512xf32> to vector<8x128xf32>
    %67 = vector.extract_strided_slice %64 {offsets = [0, 256], sizes = [8, 128], strides = [1, 1]} : vector<8x512xf32> to vector<8x128xf32>
    %68 = vector.extract_strided_slice %64 {offsets = [0, 384], sizes = [8, 128], strides = [1, 1]} : vector<8x512xf32> to vector<8x128xf32>
    %69 = arith.mulf %66, %49 : vector<8x128xf32>
    %70 = arith.mulf %65, %67 : vector<8x128xf32>
    %71 = arith.addf %69, %70 : vector<8x128xf32>
    %72 = math.tanh %71 : vector<8x128xf32>
    %73 = arith.mulf %68, %72 : vector<8x128xf32>
    %74 = arith.index_cast %c2_i32 : i32 to index
    %c0_22 = arith.constant 0 : index
    %c0_23 = arith.constant 0 : index
    %75 = vector.load %arg5[%74, %c0_22, %c0_23] : memref<8x8x128xf32, #tpu.memory_space<vmem>>, vector<1x8x128xf32>
    %76 = vector.shape_cast %75 : vector<1x8x128xf32> to vector<8x128xf32>
    %77 = vector.shape_cast %73 : vector<8x128xf32> to vector<1x8x128xf32>
    tpu.vector_store %arg5[%74, %c0_22, %c0_23], %77 {strides = array<i32>} : memref<8x8x128xf32, #tpu.memory_space<vmem>>, vector<1x8x128xf32>,
    %c3_i32 = arith.constant 3 : i32
    %78 = arith.index_cast %c3_i32 : i32 to index
    %c0_24 = arith.constant 0 : index
    %c0_25 = arith.constant 0 : index
    %79 = vector.load %arg2[%78, %c0_24, %c0_25] : memref<8x8x512xf32, #tpu.memory_space<vmem>>, vector<1x8x512xf32>
    %80 = vector.shape_cast %79 : vector<1x8x512xf32> to vector<8x512xf32>
    %81 = arith.truncf %73 : vector<8x128xf32> to vector<8x128xbf16>
    %cst_26 = arith.constant dense<0.000000e+00> : vector<8x512xf32>
    %82 = tpu.matmul %81, %3, %cst_26 {dimension_numbers = #tpu.dot_dimension_numbers<[1], [0], [0], [1], [0, 0, 1, 1], [], []>} : vector<8x128xbf16>, vector<128x512xbf16>, vector<8x512xf32> -> vector<8x512xf32>
    %83 = arith.addf %80, %82 : vector<8x512xf32>
    %84 = math.tanh %83 : vector<8x512xf32>
    %85 = arith.mulf %6, %84 : vector<8x512xf32>
    %86 = arith.addf %85, %9 : vector<8x512xf32>
    %87 = vector.extract_strided_slice %86 {offsets = [0, 0], sizes = [8, 128], strides = [1, 1]} : vector<8x512xf32> to vector<8x128xf32>
    %88 = vector.extract_strided_slice %86 {offsets = [0, 128], sizes = [8, 128], strides = [1, 1]} : vector<8x512xf32> to vector<8x128xf32>
    %89 = vector.extract_strided_slice %86 {offsets = [0, 256], sizes = [8, 128], strides = [1, 1]} : vector<8x512xf32> to vector<8x128xf32>
    %90 = vector.extract_strided_slice %86 {offsets = [0, 384], sizes = [8, 128], strides = [1, 1]} : vector<8x512xf32> to vector<8x128xf32>
    %91 = arith.mulf %88, %71 : vector<8x128xf32>
    %92 = arith.mulf %87, %89 : vector<8x128xf32>
    %93 = arith.addf %91, %92 : vector<8x128xf32>
    %94 = math.tanh %93 : vector<8x128xf32>
    %95 = arith.mulf %90, %94 : vector<8x128xf32>
    %96 = arith.index_cast %c3_i32 : i32 to index
    %c0_27 = arith.constant 0 : index
    %c0_28 = arith.constant 0 : index
    %97 = vector.load %arg5[%96, %c0_27, %c0_28] : memref<8x8x128xf32, #tpu.memory_space<vmem>>, vector<1x8x128xf32>
    %98 = vector.shape_cast %97 : vector<1x8x128xf32> to vector<8x128xf32>
    %99 = vector.shape_cast %95 : vector<8x128xf32> to vector<1x8x128xf32>
    tpu.vector_store %arg5[%96, %c0_27, %c0_28], %99 {strides = array<i32>} : memref<8x8x128xf32, #tpu.memory_space<vmem>>, vector<1x8x128xf32>,
    %c4_i32 = arith.constant 4 : i32
    %100 = arith.index_cast %c4_i32 : i32 to index
    %c0_29 = arith.constant 0 : index
    %c0_30 = arith.constant 0 : index
    %101 = vector.load %arg2[%100, %c0_29, %c0_30] : memref<8x8x512xf32, #tpu.memory_space<vmem>>, vector<1x8x512xf32>
    %102 = vector.shape_cast %101 : vector<1x8x512xf32> to vector<8x512xf32>
    %103 = arith.truncf %95 : vector<8x128xf32> to vector<8x128xbf16>
    %cst_31 = arith.constant dense<0.000000e+00> : vector<8x512xf32>
    %104 = tpu.matmul %103, %3, %cst_31 {dimension_numbers = #tpu.dot_dimension_numbers<[1], [0], [0], [1], [0, 0, 1, 1], [], []>} : vector<8x128xbf16>, vector<128x512xbf16>, vector<8x512xf32> -> vector<8x512xf32>
    %105 = arith.addf %102, %104 : vector<8x512xf32>
    %106 = math.tanh %105 : vector<8x512xf32>
    %107 = arith.mulf %6, %106 : vector<8x512xf32>
    %108 = arith.addf %107, %9 : vector<8x512xf32>
    %109 = vector.extract_strided_slice %108 {offsets = [0, 0], sizes = [8, 128], strides = [1, 1]} : vector<8x512xf32> to vector<8x128xf32>
    %110 = vector.extract_strided_slice %108 {offsets = [0, 128], sizes = [8, 128], strides = [1, 1]} : vector<8x512xf32> to vector<8x128xf32>
    %111 = vector.extract_strided_slice %108 {offsets = [0, 256], sizes = [8, 128], strides = [1, 1]} : vector<8x512xf32> to vector<8x128xf32>
    %112 = vector.extract_strided_slice %108 {offsets = [0, 384], sizes = [8, 128], strides = [1, 1]} : vector<8x512xf32> to vector<8x128xf32>
    %113 = arith.mulf %110, %93 : vector<8x128xf32>
    %114 = arith.mulf %109, %111 : vector<8x128xf32>
    %115 = arith.addf %113, %114 : vector<8x128xf32>
    %116 = math.tanh %115 : vector<8x128xf32>
    %117 = arith.mulf %112, %116 : vector<8x128xf32>
    %118 = arith.index_cast %c4_i32 : i32 to index
    %c0_32 = arith.constant 0 : index
    %c0_33 = arith.constant 0 : index
    %119 = vector.load %arg5[%118, %c0_32, %c0_33] : memref<8x8x128xf32, #tpu.memory_space<vmem>>, vector<1x8x128xf32>
    %120 = vector.shape_cast %119 : vector<1x8x128xf32> to vector<8x128xf32>
    %121 = vector.shape_cast %117 : vector<8x128xf32> to vector<1x8x128xf32>
    tpu.vector_store %arg5[%118, %c0_32, %c0_33], %121 {strides = array<i32>} : memref<8x8x128xf32, #tpu.memory_space<vmem>>, vector<1x8x128xf32>,
    %c5_i32 = arith.constant 5 : i32
    %122 = arith.index_cast %c5_i32 : i32 to index
    %c0_34 = arith.constant 0 : index
    %c0_35 = arith.constant 0 : index
    %123 = vector.load %arg2[%122, %c0_34, %c0_35] : memref<8x8x512xf32, #tpu.memory_space<vmem>>, vector<1x8x512xf32>
    %124 = vector.shape_cast %123 : vector<1x8x512xf32> to vector<8x512xf32>
    %125 = arith.truncf %117 : vector<8x128xf32> to vector<8x128xbf16>
    %cst_36 = arith.constant dense<0.000000e+00> : vector<8x512xf32>
    %126 = tpu.matmul %125, %3, %cst_36 {dimension_numbers = #tpu.dot_dimension_numbers<[1], [0], [0], [1], [0, 0, 1, 1], [], []>} : vector<8x128xbf16>, vector<128x512xbf16>, vector<8x512xf32> -> vector<8x512xf32>
    %127 = arith.addf %124, %126 : vector<8x512xf32>
    %128 = math.tanh %127 : vector<8x512xf32>
    %129 = arith.mulf %6, %128 : vector<8x512xf32>
    %130 = arith.addf %129, %9 : vector<8x512xf32>
    %131 = vector.extract_strided_slice %130 {offsets = [0, 0], sizes = [8, 128], strides = [1, 1]} : vector<8x512xf32> to vector<8x128xf32>
    %132 = vector.extract_strided_slice %130 {offsets = [0, 128], sizes = [8, 128], strides = [1, 1]} : vector<8x512xf32> to vector<8x128xf32>
    %133 = vector.extract_strided_slice %130 {offsets = [0, 256], sizes = [8, 128], strides = [1, 1]} : vector<8x512xf32> to vector<8x128xf32>
    %134 = vector.extract_strided_slice %130 {offsets = [0, 384], sizes = [8, 128], strides = [1, 1]} : vector<8x512xf32> to vector<8x128xf32>
    %135 = arith.mulf %132, %115 : vector<8x128xf32>
    %136 = arith.mulf %131, %133 : vector<8x128xf32>
    %137 = arith.addf %135, %136 : vector<8x128xf32>
    %138 = math.tanh %137 : vector<8x128xf32>
    %139 = arith.mulf %134, %138 : vector<8x128xf32>
    %140 = arith.index_cast %c5_i32 : i32 to index
    %c0_37 = arith.constant 0 : index
    %c0_38 = arith.constant 0 : index
    %141 = vector.load %arg5[%140, %c0_37, %c0_38] : memref<8x8x128xf32, #tpu.memory_space<vmem>>, vector<1x8x128xf32>
    %142 = vector.shape_cast %141 : vector<1x8x128xf32> to vector<8x128xf32>
    %143 = vector.shape_cast %139 : vector<8x128xf32> to vector<1x8x128xf32>
    tpu.vector_store %arg5[%140, %c0_37, %c0_38], %143 {strides = array<i32>} : memref<8x8x128xf32, #tpu.memory_space<vmem>>, vector<1x8x128xf32>,
    %c6_i32 = arith.constant 6 : i32
    %144 = arith.index_cast %c6_i32 : i32 to index
    %c0_39 = arith.constant 0 : index
    %c0_40 = arith.constant 0 : index
    %145 = vector.load %arg2[%144, %c0_39, %c0_40] : memref<8x8x512xf32, #tpu.memory_space<vmem>>, vector<1x8x512xf32>
    %146 = vector.shape_cast %145 : vector<1x8x512xf32> to vector<8x512xf32>
    %147 = arith.truncf %139 : vector<8x128xf32> to vector<8x128xbf16>
    %cst_41 = arith.constant dense<0.000000e+00> : vector<8x512xf32>
    %148 = tpu.matmul %147, %3, %cst_41 {dimension_numbers = #tpu.dot_dimension_numbers<[1], [0], [0], [1], [0, 0, 1, 1], [], []>} : vector<8x128xbf16>, vector<128x512xbf16>, vector<8x512xf32> -> vector<8x512xf32>
    %149 = arith.addf %146, %148 : vector<8x512xf32>
    %150 = math.tanh %149 : vector<8x512xf32>
    %151 = arith.mulf %6, %150 : vector<8x512xf32>
    %152 = arith.addf %151, %9 : vector<8x512xf32>
    %153 = vector.extract_strided_slice %152 {offsets = [0, 0], sizes = [8, 128], strides = [1, 1]} : vector<8x512xf32> to vector<8x128xf32>
    %154 = vector.extract_strided_slice %152 {offsets = [0, 128], sizes = [8, 128], strides = [1, 1]} : vector<8x512xf32> to vector<8x128xf32>
    %155 = vector.extract_strided_slice %152 {offsets = [0, 256], sizes = [8, 128], strides = [1, 1]} : vector<8x512xf32> to vector<8x128xf32>
    %156 = vector.extract_strided_slice %152 {offsets = [0, 384], sizes = [8, 128], strides = [1, 1]} : vector<8x512xf32> to vector<8x128xf32>
    %157 = arith.mulf %154, %137 : vector<8x128xf32>
    %158 = arith.mulf %153, %155 : vector<8x128xf32>
    %159 = arith.addf %157, %158 : vector<8x128xf32>
    %160 = math.tanh %159 : vector<8x128xf32>
    %161 = arith.mulf %156, %160 : vector<8x128xf32>
    %162 = arith.index_cast %c6_i32 : i32 to index
    %c0_42 = arith.constant 0 : index
    %c0_43 = arith.constant 0 : index
    %163 = vector.load %arg5[%162, %c0_42, %c0_43] : memref<8x8x128xf32, #tpu.memory_space<vmem>>, vector<1x8x128xf32>
    %164 = vector.shape_cast %163 : vector<1x8x128xf32> to vector<8x128xf32>
    %165 = vector.shape_cast %161 : vector<8x128xf32> to vector<1x8x128xf32>
    tpu.vector_store %arg5[%162, %c0_42, %c0_43], %165 {strides = array<i32>} : memref<8x8x128xf32, #tpu.memory_space<vmem>>, vector<1x8x128xf32>,
    %c7_i32 = arith.constant 7 : i32
    %166 = arith.index_cast %c7_i32 : i32 to index
    %c0_44 = arith.constant 0 : index
    %c0_45 = arith.constant 0 : index
    %167 = vector.load %arg2[%166, %c0_44, %c0_45] : memref<8x8x512xf32, #tpu.memory_space<vmem>>, vector<1x8x512xf32>
    %168 = vector.shape_cast %167 : vector<1x8x512xf32> to vector<8x512xf32>
    %169 = arith.truncf %161 : vector<8x128xf32> to vector<8x128xbf16>
    %cst_46 = arith.constant dense<0.000000e+00> : vector<8x512xf32>
    %170 = tpu.matmul %169, %3, %cst_46 {dimension_numbers = #tpu.dot_dimension_numbers<[1], [0], [0], [1], [0, 0, 1, 1], [], []>} : vector<8x128xbf16>, vector<128x512xbf16>, vector<8x512xf32> -> vector<8x512xf32>
    %171 = arith.addf %168, %170 : vector<8x512xf32>
    %172 = math.tanh %171 : vector<8x512xf32>
    %173 = arith.mulf %6, %172 : vector<8x512xf32>
    %174 = arith.addf %173, %9 : vector<8x512xf32>
    %175 = vector.extract_strided_slice %174 {offsets = [0, 0], sizes = [8, 128], strides = [1, 1]} : vector<8x512xf32> to vector<8x128xf32>
    %176 = vector.extract_strided_slice %174 {offsets = [0, 128], sizes = [8, 128], strides = [1, 1]} : vector<8x512xf32> to vector<8x128xf32>
    %177 = vector.extract_strided_slice %174 {offsets = [0, 256], sizes = [8, 128], strides = [1, 1]} : vector<8x512xf32> to vector<8x128xf32>
    %178 = vector.extract_strided_slice %174 {offsets = [0, 384], sizes = [8, 128], strides = [1, 1]} : vector<8x512xf32> to vector<8x128xf32>
    %179 = arith.mulf %176, %159 : vector<8x128xf32>
    %180 = arith.mulf %175, %177 : vector<8x128xf32>
    %181 = arith.addf %179, %180 : vector<8x128xf32>
    %182 = math.tanh %181 : vector<8x128xf32>
    %183 = arith.mulf %178, %182 : vector<8x128xf32>
    %184 = arith.index_cast %c7_i32 : i32 to index
    %c0_47 = arith.constant 0 : index
    %c0_48 = arith.constant 0 : index
    %185 = vector.load %arg5[%184, %c0_47, %c0_48] : memref<8x8x128xf32, #tpu.memory_space<vmem>>, vector<1x8x128xf32>
    %186 = vector.shape_cast %185 : vector<1x8x128xf32> to vector<8x128xf32>
    %187 = vector.shape_cast %183 : vector<8x128xf32> to vector<1x8x128xf32>
    tpu.vector_store %arg5[%184, %c0_47, %c0_48], %187 {strides = array<i32>} : memref<8x8x128xf32, #tpu.memory_space<vmem>>, vector<1x8x128xf32>,
    %c8_i32 = arith.constant 8 : i32
    %c0_49 = arith.constant 0 : index
    %c0_50 = arith.constant 0 : index
    %188 = vector.load %arg6[%c0_49, %c0_50] : memref<8x128xf32, #tpu.memory_space<vmem>>, vector<8x128xf32>
    tpu.vector_store %arg6[%c0_49, %c0_50], %183 {strides = array<i32>} : memref<8x128xf32, #tpu.memory_space<vmem>>, vector<8x128xf32>,
    %c0_51 = arith.constant 0 : index
    %c0_52 = arith.constant 0 : index
    %189 = vector.load %arg7[%c0_51, %c0_52] : memref<8x128xf32, #tpu.memory_space<vmem>>, vector<8x128xf32>
    tpu.vector_store %arg7[%c0_51, %c0_52], %181 {strides = array<i32>} : memref<8x128xf32, #tpu.memory_space<vmem>>, vector<8x128xf32>,
    return
  }
  func.func @transform_0(%arg0: i32, %arg1: i32) -> (i32, i32, i32) {
    %c0_i32 = arith.constant 0 : i32
    %c0_i32_0 = arith.constant 0 : i32
    return %arg1, %arg0, %c0_i32 : i32, i32, i32
  }
  func.func @transform_1(%arg0: i32, %arg1: i32) -> (i32, i32) {
    %c0_i32 = arith.constant 0 : i32
    %c0_i32_0 = arith.constant 0 : i32
    %c0_i32_1 = arith.constant 0 : i32
    return %c0_i32, %c0_i32_0 : i32, i32
  }
  func.func @transform_2(%arg0: i32, %arg1: i32) -> (i32, i32) {
    %c0_i32 = arith.constant 0 : i32
    %c0_i32_0 = arith.constant 0 : i32
    %c0_i32_1 = arith.constant 0 : i32
    return %c0_i32, %c0_i32_0 : i32, i32
  }
  func.func @transform_3(%arg0: i32, %arg1: i32) -> (i32, i32, i32) {
    %c0_i32 = arith.constant 0 : i32
    %c0_i32_0 = arith.constant 0 : i32
    return %arg1, %arg0, %c0_i32 : i32, i32, i32
  }
}

</mosaic_0001>

<llo_original>
// kernel: viblstm_forward.1
$region0: #{viblstm_forward.1}
  #allocation0 [shape = 'u32[]', space=smem, size = 0x4, offset = 0x4, fixed_abs, tag = 'smem constant byte address 0x4 - core index']
  #allocation1 [shape = 'u32[72,128]{1,0:T(1,128)}', space=vmem, size = 0x9000, scoped, tag = 'internal scratch']
  #allocation2 [shape = 'f32[8,128]{1,0:T(8,128)}', space=vmem, size = 0x1000, scoped, tag = 'scratch operand']
  #allocation3 [shape = 'f32[8,128]{1,0:T(8,128)}', space=vmem, size = 0x1000, scoped, tag = 'scratch operand']
  %s0 = inlined_call_operand.vmem [shape: f32[8,8,512], index: 0, kind: input, shape index: {}]
  %s1 = inlined_call_operand.vmem [shape: bf16[128,512], index: 1, kind: input, shape index: {}]
  %s2 = inlined_call_operand.vmem [shape: f32[2,512], index: 2, kind: input, shape index: {}]
  %s3 = inlined_call_operand.vmem [shape: f32[8,8,128], index: 3, kind: output, shape index: {}]
  %s4 = sld [smem:[#allocation0]]
  $region26: #{viblstm_forward.1} parent=0
    _
  %s6 = ssub.s32 1, %s4
  %s7 = scalar_select 0, %s6, %s4
  // Predicated region
  $region2: #{viblstm_forward.1} parent=0 // pred_check
    _
  $region3: #{viblstm_forward.1} parent=0 // pred_check_branch
    %9 = sbr.rel (0) target = $region5
  $region4: #{viblstm_forward.1} parent=0 // pred_region
    _
  $region5: #{viblstm_forward.1} parent=0 // pred_fallthru
    _
  // Predicated region
  $region6: #{viblstm_forward.1} parent=0 // pred_check
    _
  $region7: #{viblstm_forward.1} parent=0 // pred_check_branch
    %11 = sbr.rel (0) target = $region9
  $region8: #{viblstm_forward.1} parent=0 // pred_region
    _
  $region9: #{viblstm_forward.1} parent=0 // pred_fallthru
    _
  // Predicated region
  $region10: #{viblstm_forward.1} parent=0 // pred_check
    _
  $region11: #{viblstm_forward.1} parent=0 // pred_check_branch
    %13 = sbr.rel (0) target = $region13
  $region12: #{viblstm_forward.1} parent=0 // pred_region
    _
  $region13: #{viblstm_forward.1} parent=0 // pred_fallthru
    _
  %p14 = scmp.eq.s32.totalorder 0, 0
  // Predicated region
  $region14: #{viblstm_forward.1} parent=0 // pred_check
    %p15 = pneg %p14
  $region15: #{viblstm_forward.1} parent=0 // pred_check_branch
    %17 = sbr.rel (%p15) target = $region17
  $region16: #{viblstm_forward.1} parent=0 // pred_region
    %18 = vst [vmem:[#allocation2] sm:$0xff] 0.0
    %19 = vst [vmem:[#allocation3] sm:$0xff] 0.0
  $region17: #{viblstm_forward.1} parent=0 // pred_fallthru
    _
  %v20 = vld [vmem:[%s1] sm:$0xff]
  %v21 = vld [vmem:[%s1 + $0x8] sm:$0xff]
  %v22 = vld [vmem:[%s1 + $0x10] sm:$0xff]
  %v23 = vld [vmem:[%s1 + $0x18] sm:$0xff]
  %v24 = vld [vmem:[%s1 + $0x20] sm:$0xff]
  %v25 = vld [vmem:[%s1 + $0x28] sm:$0xff]
  %v26 = vld [vmem:[%s1 + $0x30] sm:$0xff]
  %v27 = vld [vmem:[%s1 + $0x38] sm:$0xff]
  %v28 = vld [vmem:[%s1 + $0x40] sm:$0xff]
  %v29 = vld [vmem:[%s1 + $0x48] sm:$0xff]
  %v30 = vld [vmem:[%s1 + $0x50] sm:$0xff]
  %v31 = vld [vmem:[%s1 + $0x58] sm:$0xff]
  %v32 = vld [vmem:[%s1 + $0x60] sm:$0xff]
  %v33 = vld [vmem:[%s1 + $0x68] sm:$0xff]
  %v34 = vld [vmem:[%s1 + $0x70] sm:$0xff]
  %v35 = vld [vmem:[%s1 + $0x78] sm:$0xff]
  %v36 = vld [vmem:[%s1 + $0x80] sm:$0xff]
  %v37 = vld [vmem:[%s1 + $0x88] sm:$0xff]
  %v38 = vld [vmem:[%s1 + $0x90] sm:$0xff]
  %v39 = vld [vmem:[%s1 + $0x98] sm:$0xff]
  %v40 = vld [vmem:[%s1 + $0xa0] sm:$0xff]
  %v41 = vld [vmem:[%s1 + $0xa8] sm:$0xff]
  %v42 = vld [vmem:[%s1 + $0xb0] sm:$0xff]
  %v43 = vld [vmem:[%s1 + $0xb8] sm:$0xff]
  %v44 = vld [vmem:[%s1 + $0xc0] sm:$0xff]
  %v45 = vld [vmem:[%s1 + $0xc8] sm:$0xff]
  %v46 = vld [vmem:[%s1 + $0xd0] sm:$0xff]
  %v47 = vld [vmem:[%s1 + $0xd8] sm:$0xff]
  %v48 = vld [vmem:[%s1 + $0xe0] sm:$0xff]
  %v49 = vld [vmem:[%s1 + $0xe8] sm:$0xff]
  %v50 = vld [vmem:[%s1 + $0xf0] sm:$0xff]
  %v51 = vld [vmem:[%s1 + $0xf8] sm:$0xff]
  %v52 = vld [vmem:[%s2] ss:$2 sm:$0xf]
  %v54 = vperm.slane %v52, 0
  %v55 = vperm.slane %v52, 1
  %v56 = vperm.slane %v52, 2
  %v57 = vperm.slane %v52, 3
  %s62 = scalar_lea.vmem %s2, 1
  %v63 = vld [vmem:[%s62] ss:$2 sm:$0xf]
  %v65 = vperm.slane %v63, 0
  %v66 = vperm.slane %v63, 1
  %v67 = vperm.slane %v63, 2
  %v68 = vperm.slane %v63, 3
  %v73 = vld [vmem:[#allocation2] sm:$0xff]
  %v74 = vld [vmem:[#allocation3] sm:$0xff]
  %v75 = vld [vmem:[%s0] sm:$0xff]
  %v76 = vld [vmem:[%s0 + $0x8] sm:$0xff]
  %v77 = vld [vmem:[%s0 + $0x10] sm:$0xff]
  %v78 = vld [vmem:[%s0 + $0x18] sm:$0xff]
  %v79 = vpack.c.bf16 %v73, %v73
  %v112 = vunpack.c.l.b16 %v20
  %v113 = vunpack.c.h.b16 %v20
  %v114 = vunpack.c.l.b16 %v21
  %v115 = vunpack.c.h.b16 %v21
  %v116 = vunpack.c.l.b16 %v22
  %v117 = vunpack.c.h.b16 %v22
  %v118 = vunpack.c.l.b16 %v23
  %v119 = vunpack.c.h.b16 %v23
  %v120 = vunpack.c.l.b16 %v24
  %v121 = vunpack.c.h.b16 %v24
  %v122 = vunpack.c.l.b16 %v25
  %v123 = vunpack.c.h.b16 %v25
  %v124 = vunpack.c.l.b16 %v26
  %v125 = vunpack.c.h.b16 %v26
  %v126 = vunpack.c.l.b16 %v27
  %v127 = vunpack.c.h.b16 %v27
  %v128 = vunpack.c.l.b16 %v28
  %v129 = vunpack.c.h.b16 %v28
  %v130 = vunpack.c.l.b16 %v29
  %v131 = vunpack.c.h.b16 %v29
  %v132 = vunpack.c.l.b16 %v30
  %v133 = vunpack.c.h.b16 %v30
  %v134 = vunpack.c.l.b16 %v31
  %v135 = vunpack.c.h.b16 %v31
  %v136 = vunpack.c.l.b16 %v32
  %v137 = vunpack.c.h.b16 %v32
  %v138 = vunpack.c.l.b16 %v33
  %v139 = vunpack.c.h.b16 %v33
  %v140 = vunpack.c.l.b16 %v34
  %v141 = vunpack.c.h.b16 %v34
  %v142 = vunpack.c.l.b16 %v35
  %v143 = vunpack.c.h.b16 %v35
  %v144 = vunpack.c.l.b16 %v36
  %v145 = vunpack.c.h.b16 %v36
  %v146 = vunpack.c.l.b16 %v37
  %v147 = vunpack.c.h.b16 %v37
  %v148 = vunpack.c.l.b16 %v38
  %v149 = vunpack.c.h.b16 %v38
  %v150 = vunpack.c.l.b16 %v39
  %v151 = vunpack.c.h.b16 %v39
  %v152 = vunpack.c.l.b16 %v40
  %v153 = vunpack.c.h.b16 %v40
  %v154 = vunpack.c.l.b16 %v41
  %v155 = vunpack.c.h.b16 %v41
  %v156 = vunpack.c.l.b16 %v42
  %v157 = vunpack.c.h.b16 %v42
  %v158 = vunpack.c.l.b16 %v43
  %v159 = vunpack.c.h.b16 %v43
  %v160 = vunpack.c.l.b16 %v44
  %v161 = vunpack.c.h.b16 %v44
  %v162 = vunpack.c.l.b16 %v45
  %v163 = vunpack.c.h.b16 %v45
  %v164 = vunpack.c.l.b16 %v46
  %v165 = vunpack.c.h.b16 %v46
  %v166 = vunpack.c.l.b16 %v47
  %v167 = vunpack.c.h.b16 %v47
  %v168 = vunpack.c.l.b16 %v48
  %v169 = vunpack.c.h.b16 %v48
  %v170 = vunpack.c.l.b16 %v49
  %v171 = vunpack.c.h.b16 %v49
  %v172 = vunpack.c.l.b16 %v50
  %v173 = vunpack.c.h.b16 %v50
  %v174 = vunpack.c.l.b16 %v51
  %v175 = vunpack.c.h.b16 %v51
  %v176 = vpack.c.b16 %v116, %v112
  %v177 = vpack.c.b16 %v117, %v113
  %v178 = vpack.c.b16 %v118, %v114
  %v179 = vpack.c.b16 %v119, %v115
  %v180 = vpack.c.b16 %v124, %v120
  %v181 = vpack.c.b16 %v125, %v121
  %v182 = vpack.c.b16 %v126, %v122
  %v183 = vpack.c.b16 %v127, %v123
  %v184 = vpack.c.b16 %v132, %v128
  %v185 = vpack.c.b16 %v133, %v129
  %v186 = vpack.c.b16 %v134, %v130
  %v187 = vpack.c.b16 %v135, %v131
  %v188 = vpack.c.b16 %v140, %v136
  %v189 = vpack.c.b16 %v141, %v137
  %v190 = vpack.c.b16 %v142, %v138
  %v191 = vpack.c.b16 %v143, %v139
  %v192 = vpack.c.b16 %v148, %v144
  %v193 = vpack.c.b16 %v149, %v145
  %v194 = vpack.c.b16 %v150, %v146
  %v195 = vpack.c.b16 %v151, %v147
  %v196 = vpack.c.b16 %v156, %v152
  %v197 = vpack.c.b16 %v157, %v153
  %v198 = vpack.c.b16 %v158, %v154
  %v199 = vpack.c.b16 %v159, %v155
  %v200 = vpack.c.b16 %v164, %v160
  %v201 = vpack.c.b16 %v165, %v161
  %v202 = vpack.c.b16 %v166, %v162
  %v203 = vpack.c.b16 %v167, %v163
  %v204 = vpack.c.b16 %v172, %v168
  %v205 = vpack.c.b16 %v173, %v169
  %v206 = vpack.c.b16 %v174, %v170
  %v207 = vpack.c.b16 %v175, %v171
  %240 = vmatpush.bf16.msra.mxu0 %v204
  %241 = vmatpush.bf16.msra.mxu0 %v200
  %242 = vmatpush.bf16.msra.mxu0 %v196
  %243 = vmatpush.bf16.msra.mxu0 %v192
  %244 = vmatpush.bf16.msra.mxu0 %v188
  %245 = vmatpush.bf16.msra.mxu0 %v184
  %246 = vmatpush.bf16.msra.mxu0 %v180
  %247 = vmatpush.bf16.msra.mxu0 %v176
  %248 = vmatmul.bf16.gmra.mxu0 %v79
  %v249 = vpop.f32.mrf.mxu0
  %v250 = vadd.f32 0.0, %v249
  %v251 = vpop.f32.mrf.mxu0
  %252 = vdwg.mxu0
  %253 = vmatpush.bf16.msra.mxu0 %v205
  %254 = vmatpush.bf16.msra.mxu0 %v201
  %255 = vmatpush.bf16.msra.mxu0 %v197
  %256 = vmatpush.bf16.msra.mxu0 %v193
  %257 = vmatpush.bf16.msra.mxu0 %v189
  %258 = vmatpush.bf16.msra.mxu0 %v185
  %259 = vmatpush.bf16.msra.mxu0 %v181
  %260 = vmatpush.bf16.msra.mxu0 %v177
  %261 = vmatmul.bf16.gmra.mxu0 %v79
  %v262 = vpop.f32.mrf.mxu0
  %v263 = vadd.f32 0.0, %v262
  %v264 = vpop.f32.mrf.mxu0
  %265 = vdwg.mxu0
  %266 = vmatpush.bf16.msra.mxu0 %v206
  %267 = vmatpush.bf16.msra.mxu0 %v202
  %268 = vmatpush.bf16.msra.mxu0 %v198
  %269 = vmatpush.bf16.msra.mxu0 %v194
  %270 = vmatpush.bf16.msra.mxu0 %v190
  %271 = vmatpush.bf16.msra.mxu0 %v186
  %272 = vmatpush.bf16.msra.mxu0 %v182
  %273 = vmatpush.bf16.msra.mxu0 %v178
  %274 = vmatmul.bf16.gmra.mxu0 %v79
  %v275 = vpop.f32.mrf.mxu0
  %v276 = vadd.f32 0.0, %v275
  %v277 = vpop.f32.mrf.mxu0
  %278 = vdwg.mxu0
  %279 = vmatpush.bf16.msra.mxu0 %v207
  %280 = vmatpush.bf16.msra.mxu0 %v203
  %281 = vmatpush.bf16.msra.mxu0 %v199
  %282 = vmatpush.bf16.msra.mxu0 %v195
  %283 = vmatpush.bf16.msra.mxu0 %v191
  %284 = vmatpush.bf16.msra.mxu0 %v187
  %285 = vmatpush.bf16.msra.mxu0 %v183
  %286 = vmatpush.bf16.msra.mxu0 %v179
  %287 = vmatmul.bf16.gmra.mxu0 %v79
  %v288 = vpop.f32.mrf.mxu0
  %v289 = vadd.f32 0.0, %v288
  %v290 = vpop.f32.mrf.mxu0
  %291 = vdwg.mxu0
  %v292 = vadd.f32 %v75, %v250
  %v293 = vadd.f32 %v76, %v263
  %v294 = vadd.f32 %v77, %v276
  %v295 = vadd.f32 %v78, %v289
  %v296 = vtanh.pop %v292
  %v297 = vtanh.pop %v293
  %v298 = vtanh.pop %v294
  %v299 = vtanh.pop %v295
  %v300 = vmul.f32 %v54, %v296
  %v301 = vmul.f32 %v55, %v297
  %v302 = vmul.f32 %v56, %v298
  %v303 = vmul.f32 %v57, %v299
  %v304 = vadd.f32 %v300, %v65
  %v305 = vadd.f32 %v301, %v66
  %v306 = vadd.f32 %v302, %v67
  %v307 = vadd.f32 %v303, %v68
  %v308 = vmul.f32 %v305, %v74
  %v309 = vmul.f32 %v304, %v306
  %v310 = vadd.f32 %v308, %v309
  %v311 = vtanh.pop %v310
  %v312 = vmul.f32 %v307, %v311
  %313 = vst [vmem:[%s3] sm:$0xff] %v312
  %s314 = scalar_lea.vmem %s0, 32
  %v315 = vld [vmem:[%s314] sm:$0xff]
  %v316 = vld [vmem:[%s314 + $0x8] sm:$0xff]
  %v317 = vld [vmem:[%s314 + $0x10] sm:$0xff]
  %v318 = vld [vmem:[%s314 + $0x18] sm:$0xff]
  %v319 = vpack.c.bf16 %v312, %v312
  %320 = vmatpush.bf16.msra.mxu0 %v204
  %321 = vmatpush.bf16.msra.mxu0 %v200
  %322 = vmatpush.bf16.msra.mxu0 %v196
  %323 = vmatpush.bf16.msra.mxu0 %v192
  %324 = vmatpush.bf16.msra.mxu0 %v188
  %325 = vmatpush.bf16.msra.mxu0 %v184
  %326 = vmatpush.bf16.msra.mxu0 %v180
  %327 = vmatpush.bf16.msra.mxu0 %v176
  %328 = vmatmul.bf16.gmra.mxu0 %v319
  %v329 = vpop.f32.mrf.mxu0
  %v330 = vadd.f32 0.0, %v329
  %v331 = vpop.f32.mrf.mxu0
  %332 = vdwg.mxu0
  %333 = vmatpush.bf16.msra.mxu0 %v205
  %334 = vmatpush.bf16.msra.mxu0 %v201
  %335 = vmatpush.bf16.msra.mxu0 %v197
  %336 = vmatpush.bf16.msra.mxu0 %v193
  %337 = vmatpush.bf16.msra.mxu0 %v189
  %338 = vmatpush.bf16.msra.mxu0 %v185
  %339 = vmatpush.bf16.msra.mxu0 %v181
  %340 = vmatpush.bf16.msra.mxu0 %v177
  %341 = vmatmul.bf16.gmra.mxu0 %v319
  %v342 = vpop.f32.mrf.mxu0
  %v343 = vadd.f32 0.0, %v342
  %v344 = vpop.f32.mrf.mxu0
  %345 = vdwg.mxu0
  %346 = vmatpush.bf16.msra.mxu0 %v206
  %347 = vmatpush.bf16.msra.mxu0 %v202
  %348 = vmatpush.bf16.msra.mxu0 %v198
  %349 = vmatpush.bf16.msra.mxu0 %v194
  %350 = vmatpush.bf16.msra.mxu0 %v190
  %351 = vmatpush.bf16.msra.mxu0 %v186
  %352 = vmatpush.bf16.msra.mxu0 %v182
  %353 = vmatpush.bf16.msra.mxu0 %v178
  %354 = vmatmul.bf16.gmra.mxu0 %v319
  %v355 = vpop.f32.mrf.mxu0
  %v356 = vadd.f32 0.0, %v355
  %v357 = vpop.f32.mrf.mxu0
  %358 = vdwg.mxu0
  %359 = vmatpush.bf16.msra.mxu0 %v207
  %360 = vmatpush.bf16.msra.mxu0 %v203
  %361 = vmatpush.bf16.msra.mxu0 %v199
  %362 = vmatpush.bf16.msra.mxu0 %v195
  %363 = vmatpush.bf16.msra.mxu0 %v191
  %364 = vmatpush.bf16.msra.mxu0 %v187
  %365 = vmatpush.bf16.msra.mxu0 %v183
  %366 = vmatpush.bf16.msra.mxu0 %v179
  %367 = vmatmul.bf16.gmra.mxu0 %v319
  %v368 = vpop.f32.mrf.mxu0
  %v369 = vadd.f32 0.0, %v368
  %v370 = vpop.f32.mrf.mxu0
  %371 = vdwg.mxu0
  %v372 = vadd.f32 %v315, %v330
  %v373 = vadd.f32 %v316, %v343
  %v374 = vadd.f32 %v317, %v356
  %v375 = vadd.f32 %v318, %v369
  %v376 = vtanh.pop %v372
  %v377 = vtanh.pop %v373
  %v378 = vtanh.pop %v374
  %v379 = vtanh.pop %v375
  %v380 = vmul.f32 %v54, %v376
  %v381 = vmul.f32 %v55, %v377
  %v382 = vmul.f32 %v56, %v378
  %v383 = vmul.f32 %v57, %v379
  %v384 = vadd.f32 %v380, %v65
  %v385 = vadd.f32 %v381, %v66
  %v386 = vadd.f32 %v382, %v67
  %v387 = vadd.f32 %v383, %v68
  %v388 = vmul.f32 %v385, %v310
  %v389 = vmul.f32 %v384, %v386
  %v390 = vadd.f32 %v388, %v389
  %v391 = vtanh.pop %v390
  %v392 = vmul.f32 %v387, %v391
  %s393 = scalar_lea.vmem %s3, 8
  %394 = vst [vmem:[%s393] sm:$0xff] %v392
  %s395 = scalar_lea.vmem %s0, 64
  %v396 = vld [vmem:[%s395] sm:$0xff]
  %v397 = vld [vmem:[%s395 + $0x8] sm:$0xff]
  %v398 = vld [vmem:[%s395 + $0x10] sm:$0xff]
  %v399 = vld [vmem:[%s395 + $0x18] sm:$0xff]
  %v400 = vpack.c.bf16 %v392, %v392
  %401 = vmatpush.bf16.msra.mxu0 %v204
  %402 = vmatpush.bf16.msra.mxu0 %v200
  %403 = vmatpush.bf16.msra.mxu0 %v196
  %404 = vmatpush.bf16.msra.mxu0 %v192
  %405 = vmatpush.bf16.msra.mxu0 %v188
  %406 = vmatpush.bf16.msra.mxu0 %v184
  %407 = vmatpush.bf16.msra.mxu0 %v180
  %408 = vmatpush.bf16.msra.mxu0 %v176
  %409 = vmatmul.bf16.gmra.mxu0 %v400
  %v410 = vpop.f32.mrf.mxu0
  %v411 = vadd.f32 0.0, %v410
  %v412 = vpop.f32.mrf.mxu0
  %413 = vdwg.mxu0
  %414 = vmatpush.bf16.msra.mxu0 %v205
  %415 = vmatpush.bf16.msra.mxu0 %v201
  %416 = vmatpush.bf16.msra.mxu0 %v197
  %417 = vmatpush.bf16.msra.mxu0 %v193
  %418 = vmatpush.bf16.msra.mxu0 %v189
  %419 = vmatpush.bf16.msra.mxu0 %v185
  %420 = vmatpush.bf16.msra.mxu0 %v181
  %421 = vmatpush.bf16.msra.mxu0 %v177
  %422 = vmatmul.bf16.gmra.mxu0 %v400
  %v423 = vpop.f32.mrf.mxu0
  %v424 = vadd.f32 0.0, %v423
  %v425 = vpop.f32.mrf.mxu0
  %426 = vdwg.mxu0
  %427 = vmatpush.bf16.msra.mxu0 %v206
  %428 = vmatpush.bf16.msra.mxu0 %v202
  %429 = vmatpush.bf16.msra.mxu0 %v198
  %430 = vmatpush.bf16.msra.mxu0 %v194
  %431 = vmatpush.bf16.msra.mxu0 %v190
  %432 = vmatpush.bf16.msra.mxu0 %v186
  %433 = vmatpush.bf16.msra.mxu0 %v182
  %434 = vmatpush.bf16.msra.mxu0 %v178
  %435 = vmatmul.bf16.gmra.mxu0 %v400
  %v436 = vpop.f32.mrf.mxu0
  %v437 = vadd.f32 0.0, %v436
  %v438 = vpop.f32.mrf.mxu0
  %439 = vdwg.mxu0
  %440 = vmatpush.bf16.msra.mxu0 %v207
  %441 = vmatpush.bf16.msra.mxu0 %v203
  %442 = vmatpush.bf16.msra.mxu0 %v199
  %443 = vmatpush.bf16.msra.mxu0 %v195
  %444 = vmatpush.bf16.msra.mxu0 %v191
  %445 = vmatpush.bf16.msra.mxu0 %v187
  %446 = vmatpush.bf16.msra.mxu0 %v183
  %447 = vmatpush.bf16.msra.mxu0 %v179
  %448 = vmatmul.bf16.gmra.mxu0 %v400
  %v449 = vpop.f32.mrf.mxu0
  %v450 = vadd.f32 0.0, %v449
  %v451 = vpop.f32.mrf.mxu0
  %452 = vdwg.mxu0
  %v453 = vadd.f32 %v396, %v411
  %v454 = vadd.f32 %v397, %v424
  %v455 = vadd.f32 %v398, %v437
  %v456 = vadd.f32 %v399, %v450
  %v457 = vtanh.pop %v453
  %v458 = vtanh.pop %v454
  %v459 = vtanh.pop %v455
  %v460 = vtanh.pop %v456
  %v461 = vmul.f32 %v54, %v457
  %v462 = vmul.f32 %v55, %v458
  %v463 = vmul.f32 %v56, %v459
  %v464 = vmul.f32 %v57, %v460
  %v465 = vadd.f32 %v461, %v65
  %v466 = vadd.f32 %v462, %v66
  %v467 = vadd.f32 %v463, %v67
  %v468 = vadd.f32 %v464, %v68
  %v469 = vmul.f32 %v466, %v390
  %v470 = vmul.f32 %v465, %v467
  %v471 = vadd.f32 %v469, %v470
  %v472 = vtanh.pop %v471
  %v473 = vmul.f32 %v468, %v472
  %s474 = scalar_lea.vmem %s3, 16
  %475 = vst [vmem:[%s474] sm:$0xff] %v473
  %s476 = scalar_lea.vmem %s0, 96
  %v477 = vld [vmem:[%s476] sm:$0xff]
  %v478 = vld [vmem:[%s476 + $0x8] sm:$0xff]
  %v479 = vld [vmem:[%s476 + $0x10] sm:$0xff]
  %v480 = vld [vmem:[%s476 + $0x18] sm:$0xff]
  %v481 = vpack.c.bf16 %v473, %v473
  %482 = vmatpush.bf16.msra.mxu0 %v204
  %483 = vmatpush.bf16.msra.mxu0 %v200
  %484 = vmatpush.bf16.msra.mxu0 %v196
  %485 = vmatpush.bf16.msra.mxu0 %v192
  %486 = vmatpush.bf16.msra.mxu0 %v188
  %487 = vmatpush.bf16.msra.mxu0 %v184
  %488 = vmatpush.bf16.msra.mxu0 %v180
  %489 = vmatpush.bf16.msra.mxu0 %v176
  %490 = vmatmul.bf16.gmra.mxu0 %v481
  %v491 = vpop.f32.mrf.mxu0
  %v492 = vadd.f32 0.0, %v491
  %v493 = vpop.f32.mrf.mxu0
  %494 = vdwg.mxu0
  %495 = vmatpush.bf16.msra.mxu0 %v205
  %496 = vmatpush.bf16.msra.mxu0 %v201
  %497 = vmatpush.bf16.msra.mxu0 %v197
  %498 = vmatpush.bf16.msra.mxu0 %v193
  %499 = vmatpush.bf16.msra.mxu0 %v189
  %500 = vmatpush.bf16.msra.mxu0 %v185
  %501 = vmatpush.bf16.msra.mxu0 %v181
  %502 = vmatpush.bf16.msra.mxu0 %v177
  %503 = vmatmul.bf16.gmra.mxu0 %v481
  %v504 = vpop.f32.mrf.mxu0
  %v505 = vadd.f32 0.0, %v504
  %v506 = vpop.f32.mrf.mxu0
  %507 = vdwg.mxu0
  %508 = vmatpush.bf16.msra.mxu0 %v206
  %509 = vmatpush.bf16.msra.mxu0 %v202
  %510 = vmatpush.bf16.msra.mxu0 %v198
  %511 = vmatpush.bf16.msra.mxu0 %v194
  %512 = vmatpush.bf16.msra.mxu0 %v190
  %513 = vmatpush.bf16.msra.mxu0 %v186
  %514 = vmatpush.bf16.msra.mxu0 %v182
  %515 = vmatpush.bf16.msra.mxu0 %v178
  %516 = vmatmul.bf16.gmra.mxu0 %v481
  %v517 = vpop.f32.mrf.mxu0
  %v518 = vadd.f32 0.0, %v517
  %v519 = vpop.f32.mrf.mxu0
  %520 = vdwg.mxu0
  %521 = vmatpush.bf16.msra.mxu0 %v207
  %522 = vmatpush.bf16.msra.mxu0 %v203
  %523 = vmatpush.bf16.msra.mxu0 %v199
  %524 = vmatpush.bf16.msra.mxu0 %v195
  %525 = vmatpush.bf16.msra.mxu0 %v191
  %526 = vmatpush.bf16.msra.mxu0 %v187
  %527 = vmatpush.bf16.msra.mxu0 %v183
  %528 = vmatpush.bf16.msra.mxu0 %v179
  %529 = vmatmul.bf16.gmra.mxu0 %v481
  %v530 = vpop.f32.mrf.mxu0
  %v531 = vadd.f32 0.0, %v530
  %v532 = vpop.f32.mrf.mxu0
  %533 = vdwg.mxu0
  %v534 = vadd.f32 %v477, %v492
  %v535 = vadd.f32 %v478, %v505
  %v536 = vadd.f32 %v479, %v518
  %v537 = vadd.f32 %v480, %v531
  %v538 = vtanh.pop %v534
  %v539 = vtanh.pop %v535
  %v540 = vtanh.pop %v536
  %v541 = vtanh.pop %v537
  %v542 = vmul.f32 %v54, %v538
  %v543 = vmul.f32 %v55, %v539
  %v544 = vmul.f32 %v56, %v540
  %v545 = vmul.f32 %v57, %v541
  %v546 = vadd.f32 %v542, %v65
  %v547 = vadd.f32 %v543, %v66
  %v548 = vadd.f32 %v544, %v67
  %v549 = vadd.f32 %v545, %v68
  %v550 = vmul.f32 %v547, %v471
  %v551 = vmul.f32 %v546, %v548
  %v552 = vadd.f32 %v550, %v551
  %v553 = vtanh.pop %v552
  %v554 = vmul.f32 %v549, %v553
  %s555 = scalar_lea.vmem %s3, 24
  %556 = vst [vmem:[%s555] sm:$0xff] %v554
  %s557 = scalar_lea.vmem %s0, 128
  %v558 = vld [vmem:[%s557] sm:$0xff]
  %v559 = vld [vmem:[%s557 + $0x8] sm:$0xff]
  %v560 = vld [vmem:[%s557 + $0x10] sm:$0xff]
  %v561 = vld [vmem:[%s557 + $0x18] sm:$0xff]
  %v562 = vpack.c.bf16 %v554, %v554
  %563 = vmatpush.bf16.msra.mxu0 %v204
  %564 = vmatpush.bf16.msra.mxu0 %v200
  %565 = vmatpush.bf16.msra.mxu0 %v196
  %566 = vmatpush.bf16.msra.mxu0 %v192
  %567 = vmatpush.bf16.msra.mxu0 %v188
  %568 = vmatpush.bf16.msra.mxu0 %v184
  %569 = vmatpush.bf16.msra.mxu0 %v180
  %570 = vmatpush.bf16.msra.mxu0 %v176
  %571 = vmatmul.bf16.gmra.mxu0 %v562
  %v572 = vpop.f32.mrf.mxu0
  %v573 = vadd.f32 0.0, %v572
  %v574 = vpop.f32.mrf.mxu0
  %575 = vdwg.mxu0
  %576 = vmatpush.bf16.msra.mxu0 %v205
  %577 = vmatpush.bf16.msra.mxu0 %v201
  %578 = vmatpush.bf16.msra.mxu0 %v197
  %579 = vmatpush.bf16.msra.mxu0 %v193
  %580 = vmatpush.bf16.msra.mxu0 %v189
  %581 = vmatpush.bf16.msra.mxu0 %v185
  %582 = vmatpush.bf16.msra.mxu0 %v181
  %583 = vmatpush.bf16.msra.mxu0 %v177
  %584 = vmatmul.bf16.gmra.mxu0 %v562
  %v585 = vpop.f32.mrf.mxu0
  %v586 = vadd.f32 0.0, %v585
  %v587 = vpop.f32.mrf.mxu0
  %588 = vdwg.mxu0
  %589 = vmatpush.bf16.msra.mxu0 %v206
  %590 = vmatpush.bf16.msra.mxu0 %v202
  %591 = vmatpush.bf16.msra.mxu0 %v198
  %592 = vmatpush.bf16.msra.mxu0 %v194
  %593 = vmatpush.bf16.msra.mxu0 %v190
  %594 = vmatpush.bf16.msra.mxu0 %v186
  %595 = vmatpush.bf16.msra.mxu0 %v182
  %596 = vmatpush.bf16.msra.mxu0 %v178
  %597 = vmatmul.bf16.gmra.mxu0 %v562
  %v598 = vpop.f32.mrf.mxu0
  %v599 = vadd.f32 0.0, %v598
  %v600 = vpop.f32.mrf.mxu0
  %601 = vdwg.mxu0
  %602 = vmatpush.bf16.msra.mxu0 %v207
  %603 = vmatpush.bf16.msra.mxu0 %v203
  %604 = vmatpush.bf16.msra.mxu0 %v199
  %605 = vmatpush.bf16.msra.mxu0 %v195
  %606 = vmatpush.bf16.msra.mxu0 %v191
  %607 = vmatpush.bf16.msra.mxu0 %v187
  %608 = vmatpush.bf16.msra.mxu0 %v183
  %609 = vmatpush.bf16.msra.mxu0 %v179
  %610 = vmatmul.bf16.gmra.mxu0 %v562
  %v611 = vpop.f32.mrf.mxu0
  %v612 = vadd.f32 0.0, %v611
  %v613 = vpop.f32.mrf.mxu0
  %614 = vdwg.mxu0
  %v615 = vadd.f32 %v558, %v573
  %v616 = vadd.f32 %v559, %v586
  %v617 = vadd.f32 %v560, %v599
  %v618 = vadd.f32 %v561, %v612
  %v619 = vtanh.pop %v615
  %v620 = vtanh.pop %v616
  %v621 = vtanh.pop %v617
  %v622 = vtanh.pop %v618
  %v623 = vmul.f32 %v54, %v619
  %v624 = vmul.f32 %v55, %v620
  %v625 = vmul.f32 %v56, %v621
  %v626 = vmul.f32 %v57, %v622
  %v627 = vadd.f32 %v623, %v65
  %v628 = vadd.f32 %v624, %v66
  %v629 = vadd.f32 %v625, %v67
  %v630 = vadd.f32 %v626, %v68
  %v631 = vmul.f32 %v628, %v552
  %v632 = vmul.f32 %v627, %v629
  %v633 = vadd.f32 %v631, %v632
  %v634 = vtanh.pop %v633
  %v635 = vmul.f32 %v630, %v634
  %s636 = scalar_lea.vmem %s3, 32
  %637 = vst [vmem:[%s636] sm:$0xff] %v635
  %s638 = scalar_lea.vmem %s0, 160
  %v639 = vld [vmem:[%s638] sm:$0xff]
  %v640 = vld [vmem:[%s638 + $0x8] sm:$0xff]
  %v641 = vld [vmem:[%s638 + $0x10] sm:$0xff]
  %v642 = vld [vmem:[%s638 + $0x18] sm:$0xff]
  %v643 = vpack.c.bf16 %v635, %v635
  %644 = vmatpush.bf16.msra.mxu0 %v204
  %645 = vmatpush.bf16.msra.mxu0 %v200
  %646 = vmatpush.bf16.msra.mxu0 %v196
  %647 = vmatpush.bf16.msra.mxu0 %v192
  %648 = vmatpush.bf16.msra.mxu0 %v188
  %649 = vmatpush.bf16.msra.mxu0 %v184
  %650 = vmatpush.bf16.msra.mxu0 %v180
  %651 = vmatpush.bf16.msra.mxu0 %v176
  %652 = vmatmul.bf16.gmra.mxu0 %v643
  %v653 = vpop.f32.mrf.mxu0
  %v654 = vadd.f32 0.0, %v653
  %v655 = vpop.f32.mrf.mxu0
  %656 = vdwg.mxu0
  %657 = vmatpush.bf16.msra.mxu0 %v205
  %658 = vmatpush.bf16.msra.mxu0 %v201
  %659 = vmatpush.bf16.msra.mxu0 %v197
  %660 = vmatpush.bf16.msra.mxu0 %v193
  %661 = vmatpush.bf16.msra.mxu0 %v189
  %662 = vmatpush.bf16.msra.mxu0 %v185
  %663 = vmatpush.bf16.msra.mxu0 %v181
  %664 = vmatpush.bf16.msra.mxu0 %v177
  %665 = vmatmul.bf16.gmra.mxu0 %v643
  %v666 = vpop.f32.mrf.mxu0
  %v667 = vadd.f32 0.0, %v666
  %v668 = vpop.f32.mrf.mxu0
  %669 = vdwg.mxu0
  %670 = vmatpush.bf16.msra.mxu0 %v206
  %671 = vmatpush.bf16.msra.mxu0 %v202
  %672 = vmatpush.bf16.msra.mxu0 %v198
  %673 = vmatpush.bf16.msra.mxu0 %v194
  %674 = vmatpush.bf16.msra.mxu0 %v190
  %675 = vmatpush.bf16.msra.mxu0 %v186
  %676 = vmatpush.bf16.msra.mxu0 %v182
  %677 = vmatpush.bf16.msra.mxu0 %v178
  %678 = vmatmul.bf16.gmra.mxu0 %v643
  %v679 = vpop.f32.mrf.mxu0
  %v680 = vadd.f32 0.0, %v679
  %v681 = vpop.f32.mrf.mxu0
  %682 = vdwg.mxu0
  %683 = vmatpush.bf16.msra.mxu0 %v207
  %684 = vmatpush.bf16.msra.mxu0 %v203
  %685 = vmatpush.bf16.msra.mxu0 %v199
  %686 = vmatpush.bf16.msra.mxu0 %v195
  %687 = vmatpush.bf16.msra.mxu0 %v191
  %688 = vmatpush.bf16.msra.mxu0 %v187
  %689 = vmatpush.bf16.msra.mxu0 %v183
  %690 = vmatpush.bf16.msra.mxu0 %v179
  %691 = vmatmul.bf16.gmra.mxu0 %v643
  %v692 = vpop.f32.mrf.mxu0
  %v693 = vadd.f32 0.0, %v692
  %v694 = vpop.f32.mrf.mxu0
  %695 = vdwg.mxu0
  %v696 = vadd.f32 %v639, %v654
  %v697 = vadd.f32 %v640, %v667
  %v698 = vadd.f32 %v641, %v680
  %v699 = vadd.f32 %v642, %v693
  %v700 = vtanh.pop %v696
  %v701 = vtanh.pop %v697
  %v702 = vtanh.pop %v698
  %v703 = vtanh.pop %v699
  %v704 = vmul.f32 %v54, %v700
  %v705 = vmul.f32 %v55, %v701
  %v706 = vmul.f32 %v56, %v702
  %v707 = vmul.f32 %v57, %v703
  %v708 = vadd.f32 %v704, %v65
  %v709 = vadd.f32 %v705, %v66
  %v710 = vadd.f32 %v706, %v67
  %v711 = vadd.f32 %v707, %v68
  %v712 = vmul.f32 %v709, %v633
  %v713 = vmul.f32 %v708, %v710
  %v714 = vadd.f32 %v712, %v713
  %v715 = vtanh.pop %v714
  %v716 = vmul.f32 %v711, %v715
  %s717 = scalar_lea.vmem %s3, 40
  %718 = vst [vmem:[%s717] sm:$0xff] %v716
  %s719 = scalar_lea.vmem %s0, 192
  %v720 = vld [vmem:[%s719] sm:$0xff]
  %v721 = vld [vmem:[%s719 + $0x8] sm:$0xff]
  %v722 = vld [vmem:[%s719 + $0x10] sm:$0xff]
  %v723 = vld [vmem:[%s719 + $0x18] sm:$0xff]
  %v724 = vpack.c.bf16 %v716, %v716
  %725 = vmatpush.bf16.msra.mxu0 %v204
  %726 = vmatpush.bf16.msra.mxu0 %v200
  %727 = vmatpush.bf16.msra.mxu0 %v196
  %728 = vmatpush.bf16.msra.mxu0 %v192
  %729 = vmatpush.bf16.msra.mxu0 %v188
  %730 = vmatpush.bf16.msra.mxu0 %v184
  %731 = vmatpush.bf16.msra.mxu0 %v180
  %732 = vmatpush.bf16.msra.mxu0 %v176
  %733 = vmatmul.bf16.gmra.mxu0 %v724
  %v734 = vpop.f32.mrf.mxu0
  %v735 = vadd.f32 0.0, %v734
  %v736 = vpop.f32.mrf.mxu0
  %737 = vdwg.mxu0
  %738 = vmatpush.bf16.msra.mxu0 %v205
  %739 = vmatpush.bf16.msra.mxu0 %v201
  %740 = vmatpush.bf16.msra.mxu0 %v197
  %741 = vmatpush.bf16.msra.mxu0 %v193
  %742 = vmatpush.bf16.msra.mxu0 %v189
  %743 = vmatpush.bf16.msra.mxu0 %v185
  %744 = vmatpush.bf16.msra.mxu0 %v181
  %745 = vmatpush.bf16.msra.mxu0 %v177
  %746 = vmatmul.bf16.gmra.mxu0 %v724
  %v747 = vpop.f32.mrf.mxu0
  %v748 = vadd.f32 0.0, %v747
  %v749 = vpop.f32.mrf.mxu0
  %750 = vdwg.mxu0
  %751 = vmatpush.bf16.msra.mxu0 %v206
  %752 = vmatpush.bf16.msra.mxu0 %v202
  %753 = vmatpush.bf16.msra.mxu0 %v198
  %754 = vmatpush.bf16.msra.mxu0 %v194
  %755 = vmatpush.bf16.msra.mxu0 %v190
  %756 = vmatpush.bf16.msra.mxu0 %v186
  %757 = vmatpush.bf16.msra.mxu0 %v182
  %758 = vmatpush.bf16.msra.mxu0 %v178
  %759 = vmatmul.bf16.gmra.mxu0 %v724
  %v760 = vpop.f32.mrf.mxu0
  %v761 = vadd.f32 0.0, %v760
  %v762 = vpop.f32.mrf.mxu0
  %763 = vdwg.mxu0
  %764 = vmatpush.bf16.msra.mxu0 %v207
  %765 = vmatpush.bf16.msra.mxu0 %v203
  %766 = vmatpush.bf16.msra.mxu0 %v199
  %767 = vmatpush.bf16.msra.mxu0 %v195
  %768 = vmatpush.bf16.msra.mxu0 %v191
  %769 = vmatpush.bf16.msra.mxu0 %v187
  %770 = vmatpush.bf16.msra.mxu0 %v183
  %771 = vmatpush.bf16.msra.mxu0 %v179
  %772 = vmatmul.bf16.gmra.mxu0 %v724
  %v773 = vpop.f32.mrf.mxu0
  %v774 = vadd.f32 0.0, %v773
  %v775 = vpop.f32.mrf.mxu0
  %776 = vdwg.mxu0
  %v777 = vadd.f32 %v720, %v735
  %v778 = vadd.f32 %v721, %v748
  %v779 = vadd.f32 %v722, %v761
  %v780 = vadd.f32 %v723, %v774
  %v781 = vtanh.pop %v777
  %v782 = vtanh.pop %v778
  %v783 = vtanh.pop %v779
  %v784 = vtanh.pop %v780
  %v785 = vmul.f32 %v54, %v781
  %v786 = vmul.f32 %v55, %v782
  %v787 = vmul.f32 %v56, %v783
  %v788 = vmul.f32 %v57, %v784
  %v789 = vadd.f32 %v785, %v65
  %v790 = vadd.f32 %v786, %v66
  %v791 = vadd.f32 %v787, %v67
  %v792 = vadd.f32 %v788, %v68
  %v793 = vmul.f32 %v790, %v714
  %v794 = vmul.f32 %v789, %v791
  %v795 = vadd.f32 %v793, %v794
  %v796 = vtanh.pop %v795
  %v797 = vmul.f32 %v792, %v796
  %s798 = scalar_lea.vmem %s3, 48
  %799 = vst [vmem:[%s798] sm:$0xff] %v797
  %s800 = scalar_lea.vmem %s0, 224
  %v801 = vld [vmem:[%s800] sm:$0xff]
  %v802 = vld [vmem:[%s800 + $0x8] sm:$0xff]
  %v803 = vld [vmem:[%s800 + $0x10] sm:$0xff]
  %v804 = vld [vmem:[%s800 + $0x18] sm:$0xff]
  %v805 = vpack.c.bf16 %v797, %v797
  %806 = vmatpush.bf16.msra.mxu0 %v204
  %807 = vmatpush.bf16.msra.mxu0 %v200
  %808 = vmatpush.bf16.msra.mxu0 %v196
  %809 = vmatpush.bf16.msra.mxu0 %v192
  %810 = vmatpush.bf16.msra.mxu0 %v188
  %811 = vmatpush.bf16.msra.mxu0 %v184
  %812 = vmatpush.bf16.msra.mxu0 %v180
  %813 = vmatpush.bf16.msra.mxu0 %v176
  %814 = vmatmul.bf16.gmra.mxu0 %v805
  %v815 = vpop.f32.mrf.mxu0
  %v816 = vadd.f32 0.0, %v815
  %v817 = vpop.f32.mrf.mxu0
  %818 = vdwg.mxu0
  %819 = vmatpush.bf16.msra.mxu0 %v205
  %820 = vmatpush.bf16.msra.mxu0 %v201
  %821 = vmatpush.bf16.msra.mxu0 %v197
  %822 = vmatpush.bf16.msra.mxu0 %v193
  %823 = vmatpush.bf16.msra.mxu0 %v189
  %824 = vmatpush.bf16.msra.mxu0 %v185
  %825 = vmatpush.bf16.msra.mxu0 %v181
  %826 = vmatpush.bf16.msra.mxu0 %v177
  %827 = vmatmul.bf16.gmra.mxu0 %v805
  %v828 = vpop.f32.mrf.mxu0
  %v829 = vadd.f32 0.0, %v828
  %v830 = vpop.f32.mrf.mxu0
  %831 = vdwg.mxu0
  %832 = vmatpush.bf16.msra.mxu0 %v206
  %833 = vmatpush.bf16.msra.mxu0 %v202
  %834 = vmatpush.bf16.msra.mxu0 %v198
  %835 = vmatpush.bf16.msra.mxu0 %v194
  %836 = vmatpush.bf16.msra.mxu0 %v190
  %837 = vmatpush.bf16.msra.mxu0 %v186
  %838 = vmatpush.bf16.msra.mxu0 %v182
  %839 = vmatpush.bf16.msra.mxu0 %v178
  %840 = vmatmul.bf16.gmra.mxu0 %v805
  %v841 = vpop.f32.mrf.mxu0
  %v842 = vadd.f32 0.0, %v841
  %v843 = vpop.f32.mrf.mxu0
  %844 = vdwg.mxu0
  %845 = vmatpush.bf16.msra.mxu0 %v207
  %846 = vmatpush.bf16.msra.mxu0 %v203
  %847 = vmatpush.bf16.msra.mxu0 %v199
  %848 = vmatpush.bf16.msra.mxu0 %v195
  %849 = vmatpush.bf16.msra.mxu0 %v191
  %850 = vmatpush.bf16.msra.mxu0 %v187
  %851 = vmatpush.bf16.msra.mxu0 %v183
  %852 = vmatpush.bf16.msra.mxu0 %v179
  %853 = vmatmul.bf16.gmra.mxu0 %v805
  %v854 = vpop.f32.mrf.mxu0
  %v855 = vadd.f32 0.0, %v854
  %v856 = vpop.f32.mrf.mxu0
  %857 = vdwg.mxu0
  %v858 = vadd.f32 %v801, %v816
  %v859 = vadd.f32 %v802, %v829
  %v860 = vadd.f32 %v803, %v842
  %v861 = vadd.f32 %v804, %v855
  %v862 = vtanh.pop %v858
  %v863 = vtanh.pop %v859
  %v864 = vtanh.pop %v860
  %v865 = vtanh.pop %v861
  %v866 = vmul.f32 %v54, %v862
  %v867 = vmul.f32 %v55, %v863
  %v868 = vmul.f32 %v56, %v864
  %v869 = vmul.f32 %v57, %v865
  %v870 = vadd.f32 %v866, %v65
  %v871 = vadd.f32 %v867, %v66
  %v872 = vadd.f32 %v868, %v67
  %v873 = vadd.f32 %v869, %v68
  %v874 = vmul.f32 %v871, %v795
  %v875 = vmul.f32 %v870, %v872
  %v876 = vadd.f32 %v874, %v875
  %v877 = vtanh.pop %v876
  %v878 = vmul.f32 %v873, %v877
  %s879 = scalar_lea.vmem %s3, 56
  %880 = vst [vmem:[%s879] sm:$0xff] %v878
  %881 = vst [vmem:[#allocation2] sm:$0xff] %v878
  %882 = vst [vmem:[#allocation3] sm:$0xff] %v876
  // Predicated region
  $region18: #{viblstm_forward.1} parent=0 // pred_check
    _
  $region19: #{viblstm_forward.1} parent=0 // pred_check_branch
    %884 = sbr.rel (0) target = $region21
  $region20: #{viblstm_forward.1} parent=0 // pred_region
    _
  $region21: #{viblstm_forward.1} parent=0 // pred_fallthru
    _
  // Predicated region
  $region22: #{viblstm_forward.1} parent=0 // pred_check
    _
  $region23: #{viblstm_forward.1} parent=0 // pred_check_branch
    %886 = sbr.rel (0) target = $region25
  $region24: #{viblstm_forward.1} parent=0 // pred_region
    _
  $region25: #{viblstm_forward.1} parent=0 // pred_fallthru
    _

</llo_original>
